<compile_context>
chip_gen: v7x
topology: tpu7x:2x2x1
jax: 0.10.0
libtpu: 0.0.40
codegen_flags: <defaults>
</compile_context>

<pallas_src>
import functools

import jax
import jax.numpy as jnp
from jax import lax
from jax.experimental import pallas as pl
from jax.experimental.pallas import tpu as pltpu

EMBED_DIM = 128        # Config.embedding_dim (lane-aligned for the demo)
NUM_ENTITIES = 256
NUM_RELATIONS = 32
BATCH = 8
TILE_N_MAX = 2048      # entity-axis tile cap (multiple of 128 lanes)


def _round_up(x, m):
    return ((x + m - 1) // m) * m


# ----------------------------------------------------------------------------
# Fused DistMult kernel: q @ E_tile^T -> sigmoid, one entity tile per grid step.
# ----------------------------------------------------------------------------
def _distmult_kernel(q_ref, ee_ref, o_ref):
    # q_ref  : (B, D) bf16      precombined query (same tiny block every step)
    # ee_ref : (tile_n, D) bf16 entity-table tile (streamed)
    # o_ref  : (B, tile_n) f32  score tile (lane-dense)
    s = lax.dot_general(                                   # MXU, contract on D
        q_ref[...], ee_ref[...],
        dimension_numbers=(((1,), (1,)), ((), ())),
        preferred_element_type=jnp.float32)
    o_ref[...] = jax.nn.sigmoid(s)                         # EUP, f32


# ----------------------------------------------------------------------------
# One-time parameter-side preparation (done at init, NOT per forward call).
# ----------------------------------------------------------------------------
def choose_tile_n(num_entities, tile_n_max=TILE_N_MAX):
    """Biggest 128-aligned tile <= tile_n_max; whole table if it's smaller."""
    return min(tile_n_max, _round_up(num_entities, 128))


def prepare_entity_table(emb_e, tile_n):
    """bf16 cast + zero-pad entity axis to a multiple of tile_n, once."""
    n = emb_e.shape[0]
    n_padded = _round_up(n, tile_n)
    ee = emb_e.astype(jnp.bfloat16)
    if n_padded != n:
        ee = jnp.pad(ee, ((0, n_padded - n), (0, 0)))
    return ee


# ----------------------------------------------------------------------------
# Forward: pred = sigmoid((emb_e[e1] * emb_rel[rel]) @ emb_e.T), shape (B, N)
# ----------------------------------------------------------------------------
@functools.partial(jax.jit, static_argnames=("tile_n",))
def distmult_forward(emb_e, ee_bf16, emb_rel, e1, rel, *, tile_n):
    e1 = e1.reshape(-1)       # .squeeze() of (B, 1) index tensor
    rel = rel.reshape(-1)

    # Embedding gather of B rows + elementwise product: tiny (B, D) glue kept
    # in plain JAX; inp_drop is identity in eval mode.  Single bf16 query
    # operand is passed to the kernel (product hoisted out of the tile loop).
    q = (emb_e[e1] * emb_rel[rel]).astype(jnp.bfloat16)     # (B, D)
    B, D = q.shape
    N = emb_e.shape[0]
    n_padded = ee_bf16.shape[0]
    assert n_padded % tile_n == 0

    out = pl.pallas_call(
        _distmult_kernel,
        out_shape=jax.ShapeDtypeStruct((B, n_padded), jnp.float32),
        grid_spec=pl.GridSpec(
            grid=(n_padded // tile_n,),
            in_specs=[
                pl.BlockSpec((B, D), lambda j: (0, 0)),         # query (resident)
                pl.BlockSpec((tile_n, D), lambda j: (j, 0)),    # entity-table tile
            ],
            out_specs=pl.BlockSpec((B, tile_n), lambda j: (0, j)),
        ),
        compiler_params=pltpu.CompilerParams(
            dimension_semantics=("parallel",)),  # megacore on v7x, no-op elsewhere
    )(q, ee_bf16)

    return out[:, :N] if n_padded != N else out


# ----------------------------------------------------------------------------
# Parameter construction (deterministic, xavier_normal_-style, padding_idx=0)
# ----------------------------------------------------------------------------
def xavier_normal(key, shape):
    fan_out, fan_in = shape
    std = jnp.sqrt(2.0 / (fan_in + fan_out))
    return std * jax.random.normal(key, shape, dtype=jnp.float32)


def distmult_reference(emb_e, emb_rel, e1, rel):
    # Pure-JAX f32 reference of the PyTorch forward, for correctness check.
    q = emb_e[e1.reshape(-1)] * emb_rel[rel.reshape(-1)]
    return jax.nn.sigmoid(q @ emb_e.T)


# ----------------------------------------------------------------------------
if __name__ == "__main__":
    key = jax.random.PRNGKey(0)
    k_ee, k_er, k_e1, k_rel = jax.random.split(key, 4)

    emb_e = xavier_normal(k_ee, (NUM_ENTITIES, EMBED_DIM)).at[0].set(0.0)     # padding_idx=0
    emb_rel = xavier_normal(k_er, (NUM_RELATIONS, EMBED_DIM)).at[0].set(0.0)  # padding_idx=0

    # One-time (init-time) bf16 + padded scoring table; no per-call recast.
    tile_n = choose_tile_n(NUM_ENTITIES)
    ee_bf16 = prepare_entity_table(emb_e, tile_n)

    e1 = jax.random.randint(k_e1, (BATCH, 1), 0, NUM_ENTITIES, dtype=jnp.int32)
    rel = jax.random.randint(k_rel, (BATCH, 1), 0, NUM_RELATIONS, dtype=jnp.int32)

    pred = distmult_forward(emb_e, ee_bf16, emb_rel, e1, rel, tile_n=tile_n)
    pred = jax.block_until_ready(pred)

    assert pred.shape == (BATCH, NUM_ENTITIES), pred.shape
    assert pred.dtype == jnp.float32
    assert bool(jnp.all(jnp.isfinite(pred)))
    assert bool(jnp.all((pred >= 0.0) & (pred <= 1.0)))

    ref = distmult_reference(emb_e, emb_rel, e1, rel)
    max_err = float(jnp.max(jnp.abs(pred - ref)))
    assert max_err < 2e-2, f"max abs err vs f32 reference: {max_err}"  # bf16 MXU operands

    print("KERNEL_OK")
</pallas_src>

<mosaic_0001>
module attributes {stable_mosaic.version = 11 : i64} {
  func.func @_distmult_kernel(%arg0: i32, %arg1: memref<8x128xbf16, #tpu.memory_space<vmem>>, %arg2: memref<256x128xbf16, #tpu.memory_space<vmem>>, %arg3: memref<8x256xf32, #tpu.memory_space<vmem>>) attributes {dimension_semantics = [#tpu.dimension_semantics<parallel>], iteration_bounds = array<i64: 1>, scalar_prefetch = 0 : i64, scratch_operands = 0 : i64, tpu.core_type = #tpu.core_type<tc>, window_params = [{pipeline_mode = #tpu.pipeline_mode<synchronous>, transform_indices = @transform_0, window_bounds = array<i64: 8, 128>}, {transform_indices = @transform_1, window_bounds = array<i64: 256, 128>}, {transform_indices = @transform_2, window_bounds = array<i64: 8, 256>}]} {
    %c0 = arith.constant 0 : index
    %c0_0 = arith.constant 0 : index
    %0 = vector.load %arg1[%c0, %c0_0] : memref<8x128xbf16, #tpu.memory_space<vmem>>, vector<8x128xbf16>
    %c0_1 = arith.constant 0 : index
    %c0_2 = arith.constant 0 : index
    %1 = vector.load %arg2[%c0_1, %c0_2] : memref<256x128xbf16, #tpu.memory_space<vmem>>, vector<256x128xbf16>
    %cst = arith.constant dense<0.000000e+00> : vector<8x256xf32>
    %2 = tpu.matmul %0, %1, %cst {dimension_numbers = #tpu.dot_dimension_numbers<[1], [1], [0], [0], [0, 0, 1, 0], [], []>} : vector<8x128xbf16>, vector<256x128xbf16>, vector<8x256xf32> -> vector<8x256xf32>
    %3 = arith.negf %2 : vector<8x256xf32>
    %4 = math.exp %3 : vector<8x256xf32>
    %cst_3 = arith.constant 1.000000e+00 : f32
    %5 = vector.broadcast %cst_3 : f32 to vector<8x256xf32>
    %6 = arith.addf %5, %4 : vector<8x256xf32>
    %7 = arith.divf %5, %6 : vector<8x256xf32>
    %c0_4 = arith.constant 0 : index
    %c0_5 = arith.constant 0 : index
    %8 = vector.load %arg3[%c0_4, %c0_5] : memref<8x256xf32, #tpu.memory_space<vmem>>, vector<8x256xf32>
    tpu.vector_store %arg3[%c0_4, %c0_5], %7 {strides = array<i32>} : memref<8x256xf32, #tpu.memory_space<vmem>>, vector<8x256xf32>,
    return
  }
  func.func @transform_0(%arg0: i32) -> (i32, i32) {
    %c0_i32 = arith.constant 0 : i32
    %c0_i32_0 = arith.constant 0 : i32
    %c0_i32_1 = arith.constant 0 : i32
    return %c0_i32, %c0_i32_0 : i32, i32
  }
  func.func @transform_1(%arg0: i32) -> (i32, i32) {
    %c0_i32 = arith.constant 0 : i32
    %c0_i32_0 = arith.constant 0 : i32
    return %arg0, %c0_i32 : i32, i32
  }
  func.func @transform_2(%arg0: i32) -> (i32, i32) {
    %c0_i32 = arith.constant 0 : i32
    %c0_i32_0 = arith.constant 0 : i32
    return %c0_i32, %arg0 : i32, i32
  }
}

</mosaic_0001>

<llo_original>
// kernel: distmult_forward.1
$region0: #{distmult_forward.1}
  #allocation0 [shape = 'u32[]', space=smem, size = 0x4, offset = 0x4, fixed_abs, tag = 'smem constant byte address 0x4 - core index']
  #allocation1 [shape = 'u32[144,128]{1,0:T(1,128)}', space=vmem, size = 0x12000, scoped, tag = 'internal scratch']
  %s0 = inlined_call_operand.vmem [shape: bf16[8,128], index: 0, kind: input, shape index: {}]
  %s1 = inlined_call_operand.vmem [shape: bf16[256,128], index: 1, kind: input, shape index: {}]
  %s2 = inlined_call_operand.hbm [shape: f32[8,256], index: 2, kind: output, shape index: {}]
  %s3 = sld [smem:[#allocation0]]
  $region18: #{distmult_forward.1} parent=0
    _
  %s5 = ssub.s32 1, %s3
  %s6 = scalar_select 0, %s5, %s3
  $region1: #{distmult_forward.1} parent=0
    #allocation2 [shape = 'u8[8192]{0}', space=vmem, size = 0x2000, scoped, tag = 'output window, operand 0, single buffered']
    #allocation3 [shape = 's32[1]{0}', space=sflag, size = 0x4, scoped, tag = 'scoped memory for distmult_forward.1']
    %7 = vsyncpa [#allocation3], 0
    // Predicated region
    $region2: #{distmult_forward.1} parent=1 // pred_check
      _
    $region3: #{distmult_forward.1} parent=1 // pred_check_branch
      %9 = sbr.rel (0) target = $region5
    $region4: #{distmult_forward.1} parent=1 // pred_region
      _
    $region5: #{distmult_forward.1} parent=1 // pred_fallthru
      _
    // Predicated region
    $region6: #{distmult_forward.1} parent=1 // pred_check
      _
    $region7: #{distmult_forward.1} parent=1 // pred_check_branch
      %11 = sbr.rel (0) target = $region9
    $region8: #{distmult_forward.1} parent=1 // pred_region
      _
    $region9: #{distmult_forward.1} parent=1 // pred_fallthru
      _
    %v13 = vld [vmem:[%s0] sm:$0xf]
    %v14 = vld [vmem:[%s1] sm:$0xf]
    %v15 = vld [vmem:[%s1 + $0x4] sm:$0xf]
    %v16 = vld [vmem:[%s1 + $0x8] sm:$0xf]
    %v17 = vld [vmem:[%s1 + $0xc] sm:$0xf]
    %v18 = vld [vmem:[%s1 + $0x10] sm:$0xf]
    %v19 = vld [vmem:[%s1 + $0x14] sm:$0xf]
    %v20 = vld [vmem:[%s1 + $0x18] sm:$0xf]
    %v21 = vld [vmem:[%s1 + $0x1c] sm:$0xf]
    %v22 = vld [vmem:[%s1 + $0x20] sm:$0xf]
    %v23 = vld [vmem:[%s1 + $0x24] sm:$0xf]
    %v24 = vld [vmem:[%s1 + $0x28] sm:$0xf]
    %v25 = vld [vmem:[%s1 + $0x2c] sm:$0xf]
    %v26 = vld [vmem:[%s1 + $0x30] sm:$0xf]
    %v27 = vld [vmem:[%s1 + $0x34] sm:$0xf]
    %v28 = vld [vmem:[%s1 + $0x38] sm:$0xf]
    %v29 = vld [vmem:[%s1 + $0x3c] sm:$0xf]
    %v30 = vld [vmem:[%s1 + $0x40] sm:$0xf]
    %v31 = vld [vmem:[%s1 + $0x44] sm:$0xf]
    %v32 = vld [vmem:[%s1 + $0x48] sm:$0xf]
    %v33 = vld [vmem:[%s1 + $0x4c] sm:$0xf]
    %v34 = vld [vmem:[%s1 + $0x50] sm:$0xf]
    %v35 = vld [vmem:[%s1 + $0x54] sm:$0xf]
    %v36 = vld [vmem:[%s1 + $0x58] sm:$0xf]
    %v37 = vld [vmem:[%s1 + $0x5c] sm:$0xf]
    %v38 = vld [vmem:[%s1 + $0x60] sm:$0xf]
    %v39 = vld [vmem:[%s1 + $0x64] sm:$0xf]
    %v40 = vld [vmem:[%s1 + $0x68] sm:$0xf]
    %v41 = vld [vmem:[%s1 + $0x6c] sm:$0xf]
    %v42 = vld [vmem:[%s1 + $0x70] sm:$0xf]
    %v43 = vld [vmem:[%s1 + $0x74] sm:$0xf]
    %v44 = vld [vmem:[%s1 + $0x78] sm:$0xf]
    %v45 = vld [vmem:[%s1 + $0x7c] sm:$0xf]
    %v78 = vunpack.c.l.b16 %v14
    %v79 = vunpack.c.l.b16 %v15
    %v80 = vunpack.c.l.b16 %v16
    %v81 = vunpack.c.l.b16 %v17
    %v82 = vunpack.c.l.b16 %v18
    %v83 = vunpack.c.l.b16 %v19
    %v84 = vunpack.c.l.b16 %v20
    %v85 = vunpack.c.l.b16 %v21
    %v86 = vunpack.c.l.b16 %v22
    %v87 = vunpack.c.l.b16 %v23
    %v88 = vunpack.c.l.b16 %v24
    %v89 = vunpack.c.l.b16 %v25
    %v90 = vunpack.c.l.b16 %v26
    %v91 = vunpack.c.l.b16 %v27
    %v92 = vunpack.c.l.b16 %v28
    %v93 = vunpack.c.l.b16 %v29
    %v94 = vunpack.c.l.b16 %v30
    %v95 = vunpack.c.l.b16 %v31
    %v96 = vunpack.c.l.b16 %v32
    %v97 = vunpack.c.l.b16 %v33
    %v98 = vunpack.c.l.b16 %v34
    %v99 = vunpack.c.l.b16 %v35
    %v100 = vunpack.c.l.b16 %v36
    %v101 = vunpack.c.l.b16 %v37
    %v102 = vunpack.c.l.b16 %v38
    %v103 = vunpack.c.l.b16 %v39
    %v104 = vunpack.c.l.b16 %v40
    %v105 = vunpack.c.l.b16 %v41
    %v106 = vunpack.c.l.b16 %v42
    %v107 = vunpack.c.l.b16 %v43
    %v108 = vunpack.c.l.b16 %v44
    %v109 = vunpack.c.l.b16 %v45
    %v110 = vpack.c.b16 %v79, %v78
    %v111 = vpack.c.b16 %v81, %v80
    %v112 = vpack.c.b16 %v83, %v82
    %v113 = vpack.c.b16 %v85, %v84
    %v114 = vpack.c.b16 %v87, %v86
    %v115 = vpack.c.b16 %v89, %v88
    %v116 = vpack.c.b16 %v91, %v90
    %v117 = vpack.c.b16 %v93, %v92
    %v118 = vpack.c.b16 %v95, %v94
    %v119 = vpack.c.b16 %v97, %v96
    %v120 = vpack.c.b16 %v99, %v98
    %v121 = vpack.c.b16 %v101, %v100
    %v122 = vpack.c.b16 %v103, %v102
    %v123 = vpack.c.b16 %v105, %v104
    %v124 = vpack.c.b16 %v107, %v106
    %v125 = vpack.c.b16 %v109, %v108
    %142 = vmatprep.subr.bf16.mxu0 0
    %143 = vmatpush1.bf16.xpose.msra.mxu0 %v110
    %144 = vmatprep.subr.bf16.mxu0 0
    %145 = vmatpush1.bf16.xpose.msra.mxu0 %v111
    %146 = vmatprep.subr.bf16.mxu0 0
    %147 = vmatpush1.bf16.xpose.msra.mxu0 %v112
    %148 = vmatprep.subr.bf16.mxu0 0
    %149 = vmatpush1.bf16.xpose.msra.mxu0 %v113
    %150 = vmatprep.subr.bf16.mxu0 0
    %151 = vmatpush1.bf16.xpose.msra.mxu0 %v114
    %152 = vmatprep.subr.bf16.mxu0 0
    %153 = vmatpush1.bf16.xpose.msra.mxu0 %v115
    %154 = vmatprep.subr.bf16.mxu0 0
    %155 = vmatpush1.bf16.xpose.msra.mxu0 %v116
    %156 = vmatprep.subr.bf16.mxu0 0
    %157 = vmatpush1.bf16.xpose.msra.mxu0 %v117
    %158 = vmatprep.subr.bf16.mxu0 0
    %159 = vmatpush1.bf16.xpose.msra.mxu0 %v118
    %160 = vmatprep.subr.bf16.mxu0 0
    %161 = vmatpush1.bf16.xpose.msra.mxu0 %v119
    %162 = vmatprep.subr.bf16.mxu0 0
    %163 = vmatpush1.bf16.xpose.msra.mxu0 %v120
    %164 = vmatprep.subr.bf16.mxu0 0
    %165 = vmatpush1.bf16.xpose.msra.mxu0 %v121
    %166 = vmatprep.subr.bf16.mxu0 0
    %167 = vmatpush1.bf16.xpose.msra.mxu0 %v122
    %168 = vmatprep.subr.bf16.mxu0 0
    %169 = vmatpush1.bf16.xpose.msra.mxu0 %v123
    %170 = vmatprep.subr.bf16.mxu0 0
    %171 = vmatpush1.bf16.xpose.msra.mxu0 %v124
    %172 = vmatprep.subr.bf16.mxu0 0
    %173 = vmatpush1.bf16.xpose.msra.mxu0 %v125
    %174 = vmatprep.mubr.bf16.mxu0 0
    %175 = vmatmul.mubr.bf16.gmra.mrb[0].mxu0 %v13
    %v176 = vpop.f32.mrb[0].mxu0
    %v177 = vadd.f32 0.0, %v176
    %v178 = vpop.f32.mrb[0].mxu0
    %v179 = vadd.f32 0.0, %v178
    %v180 = vpop.f32.mrb[0].mxu0
    %v181 = vpop.f32.mrb[0].mxu0
    %182 = vdwg.mxu0
    %v183 = vxor.u32 %v177, 2147483648
    %v184 = vxor.u32 %v179, 2147483648
    %v185 = vmul.f32 %v183, 1.442695
    %v186 = vpow.pop %v185
    %v187 = vmul.f32 %v184, 1.442695
    %v188 = vpow.pop %v187
    %v189 = vadd.f32 %v186, 1.0
    %v190 = vadd.f32 %v188, 1.0
    %v191 = vrcp.pop %v189
    %v192 = vmul.f32 1.0, %v191
    %v193 = vrcp.pop %v190
    %v194 = vmul.f32 1.0, %v193
    %195 = vst [vmem:[#allocation2] sm:$0xff] %v192
    %196 = vst [vmem:[#allocation2 + $0x8] sm:$0xff] %v194
    // Predicated region
    $region10: #{distmult_forward.1} parent=1 // pred_check
      _
    $region11: #{distmult_forward.1} parent=1 // pred_check_branch
      %198 = sbr.rel (0) target = $region13
    $region12: #{distmult_forward.1} parent=1 // pred_region
      %s200 = ssub.s32 256, 256
      %201 = vsyncadd [#allocation3], %s200
      %s203 = sshll.u32 [#allocation2], 4
      %s204 = int_to_ptr.vmem [resolvable:$true] %s203
      %206 = dma.vmem_to_hbm [thread:$0]  %s204, 256, %s2, [#allocation3]
    $region13: #{distmult_forward.1} parent=1 // pred_fallthru
      _
    // Predicated region
    $region14: #{distmult_forward.1} parent=1 // pred_check
      _
    $region15: #{distmult_forward.1} parent=1 // pred_check_branch
      %208 = sbr.rel (0) target = $region17
    $region16: #{distmult_forward.1} parent=1 // pred_region
      %209 = dma.done [#allocation3], 256
    $region17: #{distmult_forward.1} parent=1 // pred_fallthru
      _
    %210 = vsyncpa [#allocation3], 1

</llo_original>
